<compile_context>
chip_gen: v6e
topology: v6e:2x2x1
jax: 0.10.0
libtpu: 0.0.40
codegen_flags: <defaults>
</compile_context>

<pallas_src>
import functools

import numpy as np
import jax
import jax.numpy as jnp
from jax.experimental import pallas as pl
from jax.experimental.pallas import tpu as pltpu


def _round_up(x, m):
    return ((x + m - 1) // m) * m


def _vmem_capacity_bytes():
    try:
        return int(pltpu.get_tpu_info().vmem_capacity_bytes)
    except Exception:
        return 64 * 1024 * 1024          # conservative (v7x-sized) fallback


@functools.lru_cache(maxsize=None)
def _dfl_poly_coeffs(reg_max, use_sigmoid):
    """Offline (float64) polynomial fit of the closed-form DFL bin-sum.

    Per element/coordinate only two prediction bins are non-constant, so

        sum_k BCEWithLogits(x_k, y_k) = G0(z) - G1(z)*td_l - G1(1-z)*td_r

    with z = frac(pred*(rm-1)), x_l = f(z), x_r = f(1-z), x0 = f(0)
    (f = sigmoid or identity), sp(x) = log1p(exp(-x)) and

        G0(z) = K0 + x_l + sp(x_l) + x_r + sp(x_r)
        G1(z) = x_l - x0
        K0    = (rm-2)*(x0 + sp(x0)) - x0         (baked into G0's constant)

    G0 is even in w = z-0.5 -> degree-6 poly in u = w^2; G1 -> degree-8 poly
    in w.  Removes every transcendental from the kernel at ~1e-8 accuracy.
    """
    rm = float(reg_max)
    z = np.linspace(0.0, 1.0, 8193, dtype=np.float64)
    if use_sigmoid:
        x0 = 0.5
        x_l = 1.0 / (1.0 + np.exp(-z))
        x_r = 1.0 / (1.0 + np.exp(-(1.0 - z)))
    else:
        x0 = 0.0
        x_l = z
        x_r = 1.0 - z
    sp = lambda x: np.log1p(np.exp(-x))
    k0 = (rm - 2.0) * (x0 + float(sp(np.float64(x0)))) - x0
    g0 = k0 + x_l + sp(x_l) + x_r + sp(x_r)
    g1 = x_l - x0
    w = z - 0.5
    c0 = np.polyfit(w * w, g0, 6)
    c1 = np.polyfit(w, g1, 8)
    return tuple(float(c) for c in c0), tuple(float(c) for c in c1)


def _horner(x, coeffs):
    acc = jnp.full(x.shape, coeffs[0], dtype=x.dtype)
    for c in coeffs[1:]:
        acc = acc * x + c
    return acc


def _dfl_kernel(p_ref, t_ref, m_ref, o_ref, *, reg_max, g0_coeffs, g1_coeffs,
                ba, ba_tile, need_row_mask):
    f32 = jnp.float32
    rm1 = float(reg_max - 1)

    p = jnp.clip(p_ref[...].astype(f32) * rm1, 0.0, rm1)
    t = jnp.clip(t_ref[...].astype(f32) * rm1, 0.0, rm1)
    mask = m_ref[...].astype(f32)

    p_fl = jnp.floor(p)
    z = p - p_fl                              # pred fraction (unclamped floor)
    p_int = jnp.minimum(p_fl, reg_max - 2.0)  # left pred-active bin

    t_fl = jnp.floor(t)
    t_frac = t - t_fl
    t_int = jnp.minimum(t_fl, reg_max - 2.0)

    # Target-distribution mass on the two prediction-active bins
    # (single bin-offset difference d, comparisons reused).
    d = t_int - p_int
    is_same = d == 0.0
    one_m_tf = 1.0 - t_frac
    td_l = jnp.where(is_same, t_frac, jnp.where(d == -1.0, one_m_tf, 0.0))
    td_r = jnp.where(is_same, one_m_tf, jnp.where(d == 1.0, t_frac, 0.0))

    # Polynomial closed form -> no EUP ops at all.
    w = z - 0.5
    g0 = _horner(w * w, g0_coeffs)            # K0 + x_l + sp(x_l) + x_r + sp(x_r)
    g1 = _horner(w, g1_coeffs)                # x_l - x0
    g2 = _horner(-w, g1_coeffs)               # x_r - x0
    loss = g0 - g1 * td_l - g2 * td_r         # sum over reg_max bins of BCE

    contrib = loss * mask
    if need_row_mask:
        # Ragged last row-block: out-of-bounds rows hold unspecified data.
        # Use where (not multiply) so NaN/Inf garbage cannot leak into the sum.
        rows = jax.lax.broadcasted_iota(jnp.int32, contrib.shape, 0)
        rows = rows + pl.program_id(0) * ba_tile
        contrib = jnp.where(rows < ba, contrib, 0.0)

    # Single fused block reduction; lane-dense (1,8,128) partial-sum store.
    o_ref[...] = jnp.full(o_ref.shape, jnp.sum(contrib), dtype=o_ref.dtype)


def distribution_focal_loss(pred, target, obj_mask, *, reg_max=16,
                            use_sigmoid=True):
    """Pallas DFL forward.  pred/target: [B,A,4,H,W], obj_mask: [B,A,1,H,W]."""
    B, A, C4, H, W = pred.shape
    assert C4 == 4
    assert obj_mask.shape == (B, A, 1, H, W)
    BA = B * A
    L = H * W

    if obj_mask.dtype == jnp.bool_:
        obj_mask = obj_mask.astype(jnp.float32)

    # Native layout: free reshapes, no per-coordinate slice/pad passes.
    if L % 128 == 0:
        Lp = L
        p2 = pred.reshape(BA, 4 * L)
        t2 = target.reshape(BA, 4 * L)
        m2 = obj_mask.reshape(BA, L)
    else:
        # Fallback: one pad pass per array (still far cheaper than 9 passes).
        Lp = _round_up(L, 128)
        padL = ((0, 0), (0, 0), (0, Lp - L))
        p2 = jnp.pad(pred.reshape(BA, 4, L), padL).reshape(BA, 4 * Lp)
        t2 = jnp.pad(target.reshape(BA, 4, L), padL).reshape(BA, 4 * Lp)
        m2 = jnp.pad(obj_mask.reshape(BA, L), ((0, 0), (0, Lp - L)))

    # Per-generation block sizing: 3 streams x 2 pipeline buffers + Mosaic's
    # block-sized elementwise temporaries must fit the scoped VMEM limit.
    if _vmem_capacity_bytes() >= 96 * 1024 * 1024:        # v5e / v6e (128 MiB)
        block_budget, vmem_limit = 3 * 1024 * 1024, 80 * 1024 * 1024
    else:                                                 # v7x (64 MiB)
        block_budget, vmem_limit = 1 * 1024 * 1024, 30 * 1024 * 1024

    if BA >= 8:
        rows_budget = max(8, (block_budget // (4 * Lp)) // 8 * 8)
        ba_tile = min(rows_budget, (BA // 8) * 8)   # VMEM budget only (no 512 cap)
    else:
        ba_tile = BA                                # tiny batch: full first dim
    g_ba = pl.cdiv(BA, ba_tile)
    need_row_mask = (BA % ba_tile) != 0

    g0_coeffs, g1_coeffs = _dfl_poly_coeffs(int(reg_max), bool(use_sigmoid))
    kernel = functools.partial(
        _dfl_kernel, reg_max=int(reg_max), g0_coeffs=g0_coeffs,
        g1_coeffs=g1_coeffs, ba=BA, ba_tile=ba_tile, need_row_mask=need_row_mask)

    cost = pl.CostEstimate(
        flops=int(70 * 4 * BA * Lp),
        transcendentals=0,
        bytes_accessed=int(2 * BA * 4 * Lp * jnp.dtype(p2.dtype).itemsize
                           + BA * Lp * jnp.dtype(m2.dtype).itemsize
                           + g_ba * 4 * 8 * 128 * 4),
    )

    partials = pl.pallas_call(
        kernel,
        out_shape=jax.ShapeDtypeStruct((g_ba * 4, 8, 128), jnp.float32),
        grid_spec=pltpu.PrefetchScalarGridSpec(
            num_scalar_prefetch=0,
            # Coordinate axis innermost: the shared obj_mask block index does
            # not change with c, so it is DMA'd only once per row-tile.
            grid=(g_ba, 4),
            in_specs=[
                pl.BlockSpec((ba_tile, Lp), lambda i, c: (i, c)),   # pred
                pl.BlockSpec((ba_tile, Lp), lambda i, c: (i, c)),   # target
                pl.BlockSpec((ba_tile, Lp), lambda i, c: (i, 0)),   # obj_mask
            ],
            out_specs=pl.BlockSpec((1, 8, 128), lambda i, c: (i * 4 + c, 0, 0)),
        ),
        compiler_params=pltpu.CompilerParams(
            dimension_semantics=("parallel", "parallel"),
            vmem_limit_bytes=vmem_limit,
        ),
        cost_estimate=cost,
    )(p2, t2, m2)

    total = jnp.sum(partials[:, 0, 0])
    # /reg_max (mean over bins) folded into the final global-mean normalisation.
    return total / float(reg_max * B * A * 4 * H * W)


def _reference_dfl(pred, target, obj_mask, reg_max=16, use_sigmoid=True):
    """Pure-JAX reference mirroring the PyTorch module exactly."""
    rm = reg_max
    p = jnp.clip(pred * (rm - 1), 0.0, rm - 1.0)
    t = jnp.clip(target * (rm - 1), 0.0, rm - 1.0)

    def dist(x):
        xi = jnp.floor(x)
        xf = x - xi
        xi = jnp.clip(xi, 0, rm - 2).astype(jnp.int32)
        xr = jnp.clip(xi + 1, 0, rm - 1)
        oh_l = jax.nn.one_hot(xi, rm, axis=3, dtype=jnp.float32)
        oh_r = jax.nn.one_hot(xr, rm, axis=3, dtype=jnp.float32)
        return oh_l * xf[:, :, :, None] + oh_r * (1.0 - xf)[:, :, :, None]

    pd = dist(p)
    td = dist(t)
    x = jax.nn.sigmoid(pd) if use_sigmoid else pd
    bce = jnp.maximum(x, 0.0) - x * td + jnp.log1p(jnp.exp(-jnp.abs(x)))
    loss = bce.mean(axis=3)                                   # [B,A,4,H,W]
    mask = jnp.broadcast_to(obj_mask, loss.shape)
    return (loss * mask).mean()


if __name__ == "__main__":
    key = jax.random.PRNGKey(0)

    def run_case(B, A, H, W, use_sigmoid, k):
        k1, k2, k3 = jax.random.split(k, 3)
        pred = jax.random.uniform(k1, (B, A, 4, H, W), dtype=jnp.float32)
        target = jax.random.uniform(k2, (B, A, 4, H, W), dtype=jnp.float32)
        obj_mask = (jax.random.uniform(k3, (B, A, 1, H, W)) > 0.5).astype(jnp.float32)
        out = distribution_focal_loss(pred, target, obj_mask,
                                      reg_max=16, use_sigmoid=use_sigmoid)
        out = jax.block_until_ready(out)
        ref = _reference_dfl(pred, target, obj_mask,
                             reg_max=16, use_sigmoid=use_sigmoid)
        assert jnp.allclose(out, ref, rtol=2e-4, atol=1e-6), \
            (B, A, H, W, use_sigmoid, float(out), float(ref))

    keys = jax.random.split(key, 3)
    run_case(2, 4, 8, 16, True, keys[0])    # BA=8,  L=128: aligned fast path
    run_case(3, 4, 8, 16, True, keys[1])    # BA=12: ragged last row-block path
    run_case(2, 4, 8, 16, False, keys[2])   # use_sigmoid=False branch

    print("KERNEL_OK")
</pallas_src>

<mosaic_0001>
module attributes {stable_mosaic.version = 11 : i64} {
  func.func @_dfl_kernel(%arg0: i32, %arg1: i32, %arg2: memref<8x128xf32, #tpu.memory_space<vmem>>, %arg3: memref<8x128xf32, #tpu.memory_space<vmem>>, %arg4: memref<8x128xf32, #tpu.memory_space<vmem>>, %arg5: memref<1x8x128xf32, #tpu.memory_space<vmem>>) attributes {dimension_semantics = [#tpu.dimension_semantics<parallel>, #tpu.dimension_semantics<parallel>], iteration_bounds = array<i64: 1, 4>, scalar_prefetch = 0 : i64, scratch_operands = 0 : i64, tpu.core_type = #tpu.core_type<tc>, window_params = [{transform_indices = @transform_0, window_bounds = array<i64: 8, 128>}, {transform_indices = @transform_1, window_bounds = array<i64: 8, 128>}, {transform_indices = @transform_2, window_bounds = array<i64: 8, 128>}, {transform_indices = @transform_3, window_bounds = array<i64: 1, 8, 128>}]} {
    %c0 = arith.constant 0 : index
    %c0_0 = arith.constant 0 : index
    %0 = vector.load %arg2[%c0, %c0_0] : memref<8x128xf32, #tpu.memory_space<vmem>>, vector<8x128xf32>
    %cst = arith.constant 1.500000e+01 : f32
    %1 = vector.broadcast %cst : f32 to vector<8x128xf32>
    %2 = arith.mulf %0, %1 : vector<8x128xf32>
    %cst_1 = arith.constant 0.000000e+00 : f32
    %cst_2 = arith.constant 1.500000e+01 : f32
    %3 = vector.broadcast %cst_1 : f32 to vector<8x128xf32>
    %4 = arith.maximumf %3, %2 : vector<8x128xf32>
    %5 = vector.broadcast %cst_2 : f32 to vector<8x128xf32>
    %6 = arith.minimumf %5, %4 : vector<8x128xf32>
    %c0_3 = arith.constant 0 : index
    %c0_4 = arith.constant 0 : index
    %7 = vector.load %arg3[%c0_3, %c0_4] : memref<8x128xf32, #tpu.memory_space<vmem>>, vector<8x128xf32>
    %cst_5 = arith.constant 1.500000e+01 : f32
    %8 = vector.broadcast %cst_5 : f32 to vector<8x128xf32>
    %9 = arith.mulf %7, %8 : vector<8x128xf32>
    %cst_6 = arith.constant 0.000000e+00 : f32
    %cst_7 = arith.constant 1.500000e+01 : f32
    %10 = vector.broadcast %cst_6 : f32 to vector<8x128xf32>
    %11 = arith.maximumf %10, %9 : vector<8x128xf32>
    %12 = vector.broadcast %cst_7 : f32 to vector<8x128xf32>
    %13 = arith.minimumf %12, %11 : vector<8x128xf32>
    %c0_8 = arith.constant 0 : index
    %c0_9 = arith.constant 0 : index
    %14 = vector.load %arg4[%c0_8, %c0_9] : memref<8x128xf32, #tpu.memory_space<vmem>>, vector<8x128xf32>
    %15 = math.floor %6 : vector<8x128xf32>
    %16 = arith.subf %6, %15 : vector<8x128xf32>
    %cst_10 = arith.constant 1.400000e+01 : f32
    %17 = vector.broadcast %cst_10 : f32 to vector<8x128xf32>
    %18 = arith.minimumf %15, %17 : vector<8x128xf32>
    %19 = math.floor %13 : vector<8x128xf32>
    %20 = arith.subf %13, %19 : vector<8x128xf32>
    %cst_11 = arith.constant 1.400000e+01 : f32
    %21 = vector.broadcast %cst_11 : f32 to vector<8x128xf32>
    %22 = arith.minimumf %19, %21 : vector<8x128xf32>
    %23 = arith.subf %22, %18 : vector<8x128xf32>
    %cst_12 = arith.constant 0.000000e+00 : f32
    %24 = vector.broadcast %cst_12 : f32 to vector<8x128xf32>
    %25 = arith.cmpf oeq, %23, %24 : vector<8x128xf32>
    %cst_13 = arith.constant 1.000000e+00 : f32
    %26 = vector.broadcast %cst_13 : f32 to vector<8x128xf32>
    %27 = arith.subf %26, %20 : vector<8x128xf32>
    %cst_14 = arith.constant -1.000000e+00 : f32
    %28 = vector.broadcast %cst_14 : f32 to vector<8x128xf32>
    %29 = arith.cmpf oeq, %23, %28 : vector<8x128xf32>
    %cst_15 = arith.constant 0.000000e+00 : f32
    %30 = vector.broadcast %cst_15 : f32 to vector<8x128xf32>
    %31 = arith.select %29, %27, %30 : vector<8x128xi1>, vector<8x128xf32>
    %32 = arith.select %25, %20, %31 : vector<8x128xi1>, vector<8x128xf32>
    %cst_16 = arith.constant 1.000000e+00 : f32
    %33 = vector.broadcast %cst_16 : f32 to vector<8x128xf32>
    %34 = arith.cmpf oeq, %23, %33 : vector<8x128xf32>
    %cst_17 = arith.constant 0.000000e+00 : f32
    %35 = vector.broadcast %cst_17 : f32 to vector<8x128xf32>
    %36 = arith.select %34, %20, %35 : vector<8x128xi1>, vector<8x128xf32>
    %37 = arith.select %25, %27, %36 : vector<8x128xi1>, vector<8x128xf32>
    %cst_18 = arith.constant 5.000000e-01 : f32
    %38 = vector.broadcast %cst_18 : f32 to vector<8x128xf32>
    %39 = arith.subf %16, %38 : vector<8x128xf32>
    %40 = arith.mulf %39, %39 : vector<8x128xf32>
    %cst_19 = arith.constant 1.01280204E-6 : f32
    %41 = vector.broadcast %cst_19 : f32 to vector<8x128xf32>
    %42 = arith.mulf %41, %40 : vector<8x128xf32>
    %cst_20 = arith.constant -9.69451321E-6 : f32
    %43 = vector.broadcast %cst_20 : f32 to vector<8x128xf32>
    %44 = arith.addf %42, %43 : vector<8x128xf32>
    %45 = arith.mulf %44, %40 : vector<8x128xf32>
    %cst_21 = arith.constant 7.99288973E-5 : f32
    %46 = vector.broadcast %cst_21 : f32 to vector<8x128xf32>
    %47 = arith.addf %45, %46 : vector<8x128xf32>
    %48 = arith.mulf %47, %40 : vector<8x128xf32>
    %cst_22 = arith.constant -6.11177704E-4 : f32
    %49 = vector.broadcast %cst_22 : f32 to vector<8x128xf32>
    %50 = arith.addf %48, %49 : vector<8x128xf32>
    %51 = arith.mulf %50, %40 : vector<8x128xf32>
    %cst_23 = arith.constant 4.241790e-03 : f32
    %52 = vector.broadcast %cst_23 : f32 to vector<8x128xf32>
    %53 = arith.addf %51, %52 : vector<8x128xf32>
    %54 = arith.mulf %53, %40 : vector<8x128xf32>
    %cst_24 = arith.constant -0.0249055102 : f32
    %55 = vector.broadcast %cst_24 : f32 to vector<8x128xf32>
    %56 = arith.addf %54, %55 : vector<8x128xf32>
    %57 = arith.mulf %56, %40 : vector<8x128xf32>
    %cst_25 = arith.constant 15.2411709 : f32
    %58 = vector.broadcast %cst_25 : f32 to vector<8x128xf32>
    %59 = arith.addf %57, %58 : vector<8x128xf32>
    %cst_26 = arith.constant 5.59331856E-5 : f32
    %60 = vector.broadcast %cst_26 : f32 to vector<8x128xf32>
    %61 = arith.mulf %60, %39 : vector<8x128xf32>
    %cst_27 = arith.constant -5.78386425E-5 : f32
    %62 = vector.broadcast %cst_27 : f32 to vector<8x128xf32>
    %63 = arith.addf %61, %62 : vector<8x128xf32>
    %64 = arith.mulf %63, %39 : vector<8x128xf32>
    %cst_28 = arith.constant -5.414250e-04 : f32
    %65 = vector.broadcast %cst_28 : f32 to vector<8x128xf32>
    %66 = arith.addf %64, %65 : vector<8x128xf32>
    %67 = arith.mulf %66, %39 : vector<8x128xf32>
    %cst_29 = arith.constant 0.00113015645 : f32
    %68 = vector.broadcast %cst_29 : f32 to vector<8x128xf32>
    %69 = arith.addf %67, %68 : vector<8x128xf32>
    %70 = arith.mulf %69, %39 : vector<8x128xf32>
    %cst_30 = arith.constant 0.0043647741 : f32
    %71 = vector.broadcast %cst_30 : f32 to vector<8x128xf32>
    %72 = arith.addf %70, %71 : vector<8x128xf32>
    %73 = arith.mulf %72, %39 : vector<8x128xf32>
    %cst_31 = arith.constant -0.0160594583 : f32
    %74 = vector.broadcast %cst_31 : f32 to vector<8x128xf32>
    %75 = arith.addf %73, %74 : vector<8x128xf32>
    %76 = arith.mulf %75, %39 : vector<8x128xf32>
    %cst_32 = arith.constant -0.0287783965 : f32
    %77 = vector.broadcast %cst_32 : f32 to vector<8x128xf32>
    %78 = arith.addf %76, %77 : vector<8x128xf32>
    %79 = arith.mulf %78, %39 : vector<8x128xf32>
    %cst_33 = arith.constant 0.23500371 : f32
    %80 = vector.broadcast %cst_33 : f32 to vector<8x128xf32>
    %81 = arith.addf %79, %80 : vector<8x128xf32>
    %82 = arith.mulf %81, %39 : vector<8x128xf32>
    %cst_34 = arith.constant 0.12245933 : f32
    %83 = vector.broadcast %cst_34 : f32 to vector<8x128xf32>
    %84 = arith.addf %82, %83 : vector<8x128xf32>
    %cst_35 = arith.constant 0.000000e+00 : f32
    %85 = vector.broadcast %cst_35 : f32 to vector<8x128xf32>
    %86 = arith.subf %85, %39 : vector<8x128xf32>
    %cst_36 = arith.constant 5.59331856E-5 : f32
    %87 = vector.broadcast %cst_36 : f32 to vector<8x128xf32>
    %88 = arith.mulf %87, %86 : vector<8x128xf32>
    %cst_37 = arith.constant -5.78386425E-5 : f32
    %89 = vector.broadcast %cst_37 : f32 to vector<8x128xf32>
    %90 = arith.addf %88, %89 : vector<8x128xf32>
    %91 = arith.mulf %90, %86 : vector<8x128xf32>
    %cst_38 = arith.constant -5.414250e-04 : f32
    %92 = vector.broadcast %cst_38 : f32 to vector<8x128xf32>
    %93 = arith.addf %91, %92 : vector<8x128xf32>
    %94 = arith.mulf %93, %86 : vector<8x128xf32>
    %cst_39 = arith.constant 0.00113015645 : f32
    %95 = vector.broadcast %cst_39 : f32 to vector<8x128xf32>
    %96 = arith.addf %94, %95 : vector<8x128xf32>
    %97 = arith.mulf %96, %86 : vector<8x128xf32>
    %cst_40 = arith.constant 0.0043647741 : f32
    %98 = vector.broadcast %cst_40 : f32 to vector<8x128xf32>
    %99 = arith.addf %97, %98 : vector<8x128xf32>
    %100 = arith.mulf %99, %86 : vector<8x128xf32>
    %cst_41 = arith.constant -0.0160594583 : f32
    %101 = vector.broadcast %cst_41 : f32 to vector<8x128xf32>
    %102 = arith.addf %100, %101 : vector<8x128xf32>
    %103 = arith.mulf %102, %86 : vector<8x128xf32>
    %cst_42 = arith.constant -0.0287783965 : f32
    %104 = vector.broadcast %cst_42 : f32 to vector<8x128xf32>
    %105 = arith.addf %103, %104 : vector<8x128xf32>
    %106 = arith.mulf %105, %86 : vector<8x128xf32>
    %cst_43 = arith.constant 0.23500371 : f32
    %107 = vector.broadcast %cst_43 : f32 to vector<8x128xf32>
    %108 = arith.addf %106, %107 : vector<8x128xf32>
    %109 = arith.mulf %108, %86 : vector<8x128xf32>
    %cst_44 = arith.constant 0.12245933 : f32
    %110 = vector.broadcast %cst_44 : f32 to vector<8x128xf32>
    %111 = arith.addf %109, %110 : vector<8x128xf32>
    %112 = arith.mulf %84, %32 : vector<8x128xf32>
    %113 = arith.subf %59, %112 : vector<8x128xf32>
    %114 = arith.mulf %111, %37 : vector<8x128xf32>
    %115 = arith.subf %113, %114 : vector<8x128xf32>
    %116 = arith.mulf %115, %14 : vector<8x128xf32>
    %117 = vector.shape_cast %116 : vector<8x128xf32> to vector<1x8x128xf32>
    %cst_45 = arith.constant dense<0.000000e+00> : vector<1xf32>
    %118 = vector.multi_reduction <add>, %117, %cst_45 [1, 2] : vector<1x8x128xf32> to vector<1xf32>
    %119 = vector.shape_cast %118 : vector<1xf32> to vector<1x1x1xf32>
    %120 = vector.extract %119[0, 0, 0] : f32 from vector<1x1x1xf32>
    %121 = vector.broadcast %120 : f32 to vector<1x8x128xf32>
    %c0_46 = arith.constant 0 : index
    %c0_47 = arith.constant 0 : index
    %c0_48 = arith.constant 0 : index
    %122 = vector.load %arg5[%c0_46, %c0_47, %c0_48] : memref<1x8x128xf32, #tpu.memory_space<vmem>>, vector<1x8x128xf32>
    tpu.vector_store %arg5[%c0_46, %c0_47, %c0_48], %121 {strides = array<i32>} : memref<1x8x128xf32, #tpu.memory_space<vmem>>, vector<1x8x128xf32>,
    return
  }
  func.func @transform_0(%arg0: i32, %arg1: i32) -> (i32, i32) {
    %c0_i32 = arith.constant 0 : i32
    return %arg0, %arg1 : i32, i32
  }
  func.func @transform_1(%arg0: i32, %arg1: i32) -> (i32, i32) {
    %c0_i32 = arith.constant 0 : i32
    return %arg0, %arg1 : i32, i32
  }
  func.func @transform_2(%arg0: i32, %arg1: i32) -> (i32, i32) {
    %c0_i32 = arith.constant 0 : i32
    %c0_i32_0 = arith.constant 0 : i32
    return %arg0, %c0_i32 : i32, i32
  }
  func.func @transform_3(%arg0: i32, %arg1: i32) -> (i32, i32, i32) {
    %c4_i32 = arith.constant 4 : i32
    %0 = arith.muli %arg0, %c4_i32 : i32
    %1 = arith.addi %0, %arg1 : i32
    %c0_i32 = arith.constant 0 : i32
    %c0_i32_0 = arith.constant 0 : i32
    %c0_i32_1 = arith.constant 0 : i32
    return %1, %c0_i32, %c0_i32_0 : i32, i32, i32
  }
}

</mosaic_0001>

<llo_original>
// kernel: tpu_custom_call.1
$region0: #{tpu_custom_call.1}
  #allocation0 [shape = 'u32[]', space=smem, size = 0x4, offset = 0x4, fixed_abs, tag = 'smem constant byte address 0x4 - core index']
  #allocation1 [shape = 'u32[144,128]{1,0:T(1,128)}', space=vmem, size = 0x12000, scoped, tag = 'internal scratch']
  %s0 = inlined_call_operand.hbm [shape: f32[8,512], index: 0, kind: input, shape index: {}]
  %s1 = inlined_call_operand.hbm [shape: f32[8,512], index: 1, kind: input, shape index: {}]
  %s2 = inlined_call_operand.hbm [shape: f32[8,128], index: 2, kind: input, shape index: {}]
  %s3 = inlined_call_operand.hbm [shape: f32[4,8,128], index: 3, kind: output, shape index: {}]
  %s4 = sld [smem:[#allocation0]]
  $region57: #{tpu_custom_call.1} parent=0
    _
  %s6 = ssub.s32 1, %s4
  %s7 = scalar_select 0, %s6, %s4
  $region1: #{tpu_custom_call.1} parent=0
    #allocation2 [shape = 'u8[8192]{0}', space=vmem, size = 0x2000, scoped, tag = 'input window, operand 0']
    #allocation3 [shape = 's32[2]{0}', space=sflag, size = 0x8, scoped, tag = 'scoped memory for tpu_custom_call.1']
    #allocation4 [shape = 's32[2]{0}', space=sflag, size = 0x8, scoped, tag = 'scoped memory for tpu_custom_call.1']
    #allocation5 [shape = 'u8[8192]{0}', space=vmem, size = 0x2000, scoped, tag = 'input window, operand 1']
    #allocation6 [shape = 's32[2]{0}', space=sflag, size = 0x8, scoped, tag = 'scoped memory for tpu_custom_call.1']
    #allocation7 [shape = 'u8[4096]{0}', space=vmem, size = 0x1000, scoped, tag = 'input window, operand 2, single buffered']
    #allocation8 [shape = 'u8[8192]{0}', space=vmem, size = 0x2000, scoped, tag = 'output window, operand 0']
    %8 = vsyncpa [#allocation3], 0
    %s9 = scalar_lea.sflag [#allocation3], 1
    %10 = vsyncpa %s9, 0
    %11 = vsyncpa [#allocation6], 0
    %s12 = scalar_lea.sflag [#allocation6], 1
    %13 = vsyncpa %s12, 0
    %14 = vsyncpa [#allocation4], 0
    %s15 = scalar_lea.sflag [#allocation4], 1
    %16 = vsyncpa %s15, 0
    loop: start=0, step=1, limit=6
    $region2: #{tpu_custom_call.1} parent=1 // loop_pre_header
      _
    $region3: #{tpu_custom_call.1} parent=1 // loop_header
      %s18 = sphi 0, %s22
      %p19 = scmp.ge.s32.totalorder %s18, 6
      %s25 = sphi 0, %s37
      %s26 = sphi 0, %s33
      %s27 = sphi 0, %s25
      %s28 = sphi 0, %s26
      %s29 = sphi 0, %s27
      %s30 = sphi 0, %s28
      %s42 = sphi 0, %s44
      %s45 = sphi 0, %s42
      %s46 = sphi 0, %s45
      %s62 = sphi 0, %s46
      %s70 = sphi 0, %s72
      %s73 = sphi 0, %s70
      %s74 = sphi 0, %s73
      %s90 = sphi 0, %s74
      %s96 = sphi 0, %s98
      %s99 = sphi 0, %s96
      %s100 = sphi 0, %s99
      %s116 = sphi 0, %s100
      %s126 = sphi 0, %s128
      %s129 = sphi 0, %s126
      %s130 = sphi 0, %s129
      %s146 = sphi 0, %s130
    $region4: #{tpu_custom_call.1} parent=1 // loop_header_branch
      %21 = sbr.rel (%p19) target = $region8
    $region5: #{tpu_custom_call.1} parent=1 // loop_body
      %s23 = ssub.s32 %s18, 1
      %s24 = ssub.s32 %s18, 2
      %s31 = sadd.s32 1, %s26
      %p32 = scmp.ge.s32.totalorder %s31, 4
      %s33 = scalar_select %p32, 0, %s31
      %s34 = sadd.s32 1, %s25
      %s35 = scalar_select %p32, %s34, %s25
      %p36 = scmp.ge.s32.totalorder %s35, 1
      %s37 = scalar_select %p36, 0, %s35
      %s38 = ssub.s32 %s25, %s37
      %s39 = ssub.s32 %s26, %s33
      %s40 = sor.u32 %s38, %s39
      %p41 = scmp.eq.s32.totalorder %s40, 0
      %s43 = sadd.s32 %s42, 1
      %s44 = scalar_select %p41, %s42, %s43
      %p47 = pneg %p41
      %p48 = scmp.eq.s32.totalorder %s18, 3
      %p49 = por %p47, %p48
      %p50 = scmp.ne.s32.totalorder %s42, %s45
      %p51 = scmp.eq.s32.totalorder %s18, 0
      %p52 = por %p50, %p51
      %p53 = scmp.ne.s32.totalorder %s42, %s45
      %p54 = scmp.eq.s32.totalorder %s23, 3
      %p55 = por %p53, %p54
      %p56 = scmp.ne.s32.totalorder %s45, %s46
      %p57 = scmp.eq.s32.totalorder %s23, 0
      %p58 = por %p56, %p57
      %p59 = scmp.ne.s32.totalorder %s45, %s46
      %p60 = scmp.eq.s32.totalorder %s24, 3
      %p61 = por %p59, %p60
      %p63 = scmp.ne.s32.totalorder %s46, %s62
      %p64 = scmp.eq.s32.totalorder %s24, 0
      %p65 = por %p63, %p64
      %s66 = ssub.s32 %s25, %s37
      %s67 = ssub.s32 %s26, %s33
      %s68 = sor.u32 %s66, %s67
      %p69 = scmp.eq.s32.totalorder %s68, 0
      %s71 = sadd.s32 %s70, 1
      %s72 = scalar_select %p69, %s70, %s71
      %p75 = pneg %p69
      %p76 = scmp.eq.s32.totalorder %s18, 3
      %p77 = por %p75, %p76
      %p78 = scmp.ne.s32.totalorder %s70, %s73
      %p79 = scmp.eq.s32.totalorder %s18, 0
      %p80 = por %p78, %p79
      %p81 = scmp.ne.s32.totalorder %s70, %s73
      %p82 = scmp.eq.s32.totalorder %s23, 3
      %p83 = por %p81, %p82
      %p84 = scmp.ne.s32.totalorder %s73, %s74
      %p85 = scmp.eq.s32.totalorder %s23, 0
      %p86 = por %p84, %p85
      %p87 = scmp.ne.s32.totalorder %s73, %s74
      %p88 = scmp.eq.s32.totalorder %s24, 3
      %p89 = por %p87, %p88
      %p91 = scmp.ne.s32.totalorder %s74, %s90
      %p92 = scmp.eq.s32.totalorder %s24, 0
      %p93 = por %p91, %p92
      %s94 = ssub.s32 %s25, %s37
      %p95 = scmp.eq.s32.totalorder %s94, 0
      %s97 = sadd.s32 %s96, 1
      %s98 = scalar_select %p95, %s96, %s97
      %p101 = pneg %p95
      %p102 = scmp.eq.s32.totalorder %s18, 3
      %p103 = por %p101, %p102
      %p104 = scmp.ne.s32.totalorder %s96, %s99
      %p105 = scmp.eq.s32.totalorder %s18, 0
      %p106 = por %p104, %p105
      %p107 = scmp.ne.s32.totalorder %s96, %s99
      %p108 = scmp.eq.s32.totalorder %s23, 3
      %p109 = por %p107, %p108
      %p110 = scmp.ne.s32.totalorder %s99, %s100
      %p111 = scmp.eq.s32.totalorder %s23, 0
      %p112 = por %p110, %p111
      %p113 = scmp.ne.s32.totalorder %s99, %s100
      %p114 = scmp.eq.s32.totalorder %s24, 3
      %p115 = por %p113, %p114
      %p117 = scmp.ne.s32.totalorder %s100, %s116
      %p118 = scmp.eq.s32.totalorder %s24, 0
      %p119 = por %p117, %p118
      %s120 = smul.u32 %s25, 4
      %s121 = sadd.s32 %s120, %s26
      %s122 = smul.u32 %s37, 4
      %s123 = sadd.s32 %s122, %s33
      %s124 = ssub.s32 %s121, %s123
      %p125 = scmp.eq.s32.totalorder %s124, 0
      %s127 = sadd.s32 %s126, 1
      %s128 = scalar_select %p125, %s126, %s127
      %p131 = pneg %p125
      %p132 = scmp.eq.s32.totalorder %s18, 3
      %p133 = por %p131, %p132
      %p134 = scmp.ne.s32.totalorder %s126, %s129
      %p135 = scmp.eq.s32.totalorder %s18, 0
      %p136 = por %p134, %p135
      %p137 = scmp.ne.s32.totalorder %s126, %s129
      %p138 = scmp.eq.s32.totalorder %s23, 3
      %p139 = por %p137, %p138
      %p140 = scmp.ne.s32.totalorder %s129, %s130
      %p141 = scmp.eq.s32.totalorder %s23, 0
      %p142 = por %p140, %p141
      %p143 = scmp.ne.s32.totalorder %s129, %s130
      %p144 = scmp.eq.s32.totalorder %s24, 3
      %p145 = por %p143, %p144
      %p147 = scmp.ne.s32.totalorder %s130, %s146
      %p148 = scmp.eq.s32.totalorder %s24, 0
      %p149 = por %p147, %p148
      %p150 = scmp.le.s32.totalorder 1, %s18
      %p151 = scmp.lt.s32.totalorder %s18, 5
      %p152 = pnand %p150, %p151
      %p153 = pneg %p152
      // Predicated region
      $region9: #{tpu_custom_call.1} parent=5 // pred_check
        _
      $region10: #{tpu_custom_call.1} parent=5 // pred_check_branch
        %155 = sbr.rel (%p152) target = $region12
      $region11: #{tpu_custom_call.1} parent=5 // pred_region
        %s156 = ssub.s32 %s18, 1
        // Predicated region
        $region13: #{tpu_custom_call.1} parent=11 // pred_check
          %p157 = pneg %p112
        $region14: #{tpu_custom_call.1} parent=11 // pred_check_branch
          %159 = sbr.rel (%p157) target = $region16
        $region15: #{tpu_custom_call.1} parent=11 // pred_region
          %s161 = ssub.s32 128, 128
          %162 = vsyncadd [#allocation6], %s161
          %s163 = smul.addr %s27, 128
          %s164 = scalar_lea.hbm %s2, %s163
          %s166 = sshll.u32 [#allocation7], 4
          %s167 = int_to_ptr.vmem [resolvable:$true] %s166
          %169 = dma.hbm_to_vmem [thread:$0]  %s164, 128, %s167, [#allocation6]
        $region16: #{tpu_custom_call.1} parent=11 // pred_fallthru
          _
      $region12: #{tpu_custom_call.1} parent=5 // pred_fallthru
        _
      %p170 = scmp.lt.s32.totalorder %s18, 4
      // Predicated region
      $region17: #{tpu_custom_call.1} parent=5 // pred_check
        %p171 = pneg %p170
      $region18: #{tpu_custom_call.1} parent=5 // pred_check_branch
        %173 = sbr.rel (%p171) target = $region20
      $region19: #{tpu_custom_call.1} parent=5 // pred_region
        // Predicated region
        $region21: #{tpu_custom_call.1} parent=19 // pred_check
          %p174 = pneg %p52
        $region22: #{tpu_custom_call.1} parent=19 // pred_check_branch
          %176 = sbr.rel (%p174) target = $region24
        $region23: #{tpu_custom_call.1} parent=19 // pred_region
          %s177 = sand.u32 %s42, 1
          %s178 = scalar_lea.sflag [#allocation3], %s177
          %s179 = sand.u32 %s42, 1
          %s180 = smul.addr %s179, 8
          %s181 = scalar_lea.vmem [#allocation2], %s180
          %s183 = ssub.s32 128, 128
          %184 = vsyncadd %s178, %s183
          %s185 = smul.addr %s25, 4
          %s186 = sadd.s32 %s26, %s185
          %s187 = smul.addr %s186, 128
          %s188 = scalar_lea.hbm %s0, %s187
          %s190 = sshll.u32 %s181, 4
          %s191 = int_to_ptr.vmem [resolvable:$true] %s190
          %193 = dma.hbm_to_vmem [thread:$0]  %s188, 128, %s191, %s178
        $region24: #{tpu_custom_call.1} parent=19 // pred_fallthru
          _
        // Predicated region
        $region25: #{tpu_custom_call.1} parent=19 // pred_check
          %p194 = pneg %p80
        $region26: #{tpu_custom_call.1} parent=19 // pred_check_branch
          %196 = sbr.rel (%p194) target = $region28
        $region27: #{tpu_custom_call.1} parent=19 // pred_region
          %s197 = sand.u32 %s18, 1
          %s198 = scalar_lea.sflag [#allocation6], %s197
          %s199 = sand.u32 %s70, 1
          %s200 = smul.addr %s199, 8
          %s201 = scalar_lea.vmem [#allocation5], %s200
          %s203 = ssub.s32 128, 128
          %204 = vsyncadd %s198, %s203
          %s205 = smul.addr %s25, 4
          %s206 = sadd.s32 %s26, %s205
          %s207 = smul.addr %s206, 128
          %s208 = scalar_lea.hbm %s1, %s207
          %s210 = sshll.u32 %s201, 4
          %s211 = int_to_ptr.vmem [resolvable:$true] %s210
          %213 = dma.hbm_to_vmem [thread:$0]  %s208, 128, %s211, %s198
        $region28: #{tpu_custom_call.1} parent=19 // pred_fallthru
          _
      $region20: #{tpu_custom_call.1} parent=5 // pred_fallthru
        _
      %p214 = scmp.le.s32.totalorder 1, %s18
      %p215 = scmp.lt.s32.totalorder %s18, 5
      %p216 = pnand %p214, %p215
      %p217 = pneg %p216
      // Predicated region
      $region29: #{tpu_custom_call.1} parent=5 // pred_check
        _
      $region30: #{tpu_custom_call.1} parent=5 // pred_check_branch
        %219 = sbr.rel (%p216) target = $region32
      $region31: #{tpu_custom_call.1} parent=5 // pred_region
        %s220 = ssub.s32 %s18, 1
        %s221 = sand.u32 %s45, 1
        %s222 = scalar_lea.sflag [#allocation3], %s221
        %s223 = sand.u32 %s45, 1
        %s224 = smul.addr %s223, 8
        %s225 = scalar_lea.vmem [#allocation2], %s224
        // Predicated region
        $region33: #{tpu_custom_call.1} parent=31 // pred_check
          %p226 = pneg %p58
        $region34: #{tpu_custom_call.1} parent=31 // pred_check_branch
          %228 = sbr.rel (%p226) target = $region36
        $region35: #{tpu_custom_call.1} parent=31 // pred_region
          %229 = dma.done %s222, 128
        $region36: #{tpu_custom_call.1} parent=31 // pred_fallthru
          _
        %s230 = sand.u32 %s23, 1
        %s231 = scalar_lea.sflag [#allocation6], %s230
        %s232 = sand.u32 %s73, 1
        %s233 = smul.addr %s232, 8
        %s234 = scalar_lea.vmem [#allocation5], %s233
        // Predicated region
        $region37: #{tpu_custom_call.1} parent=31 // pred_check
          %p235 = pneg %p86
        $region38: #{tpu_custom_call.1} parent=31 // pred_check_branch
          %237 = sbr.rel (%p235) target = $region40
        $region39: #{tpu_custom_call.1} parent=31 // pred_region
          %238 = dma.done %s231, 128
        $region40: #{tpu_custom_call.1} parent=31 // pred_fallthru
          _
        // Predicated region
        $region41: #{tpu_custom_call.1} parent=31 // pred_check
          %p239 = pneg %p112
        $region42: #{tpu_custom_call.1} parent=31 // pred_check_branch
          %241 = sbr.rel (%p239) target = $region44
        $region43: #{tpu_custom_call.1} parent=31 // pred_region
          %242 = dma.done [#allocation6], 128
        $region44: #{tpu_custom_call.1} parent=31 // pred_fallthru
          _
        %s243 = sand.u32 %s45, 1
        %s244 = scalar_lea.sflag [#allocation3], %s243
        %s245 = sand.u32 %s45, 1
        %s246 = smul.addr %s245, 8
        %s247 = scalar_lea.vmem [#allocation2], %s246
        %p248 = pneg %p58
        %p249 = pneg %p55
        %s250 = sand.u32 %s23, 1
        %s251 = scalar_lea.sflag [#allocation6], %s250
        %s252 = sand.u32 %s73, 1
        %s253 = smul.addr %s252, 8
        %s254 = scalar_lea.vmem [#allocation5], %s253
        %p255 = pneg %p86
        %p256 = pneg %p83
        %p257 = pneg %p112
        %p258 = pneg %p109
        %p259 = pneg %p142
        %p260 = pneg %p139
        %s261 = sand.u32 %s129, 1
        %s262 = scalar_lea.sflag [#allocation4], %s261
        %s263 = sand.u32 %s129, 1
        %s264 = smul.addr %s263, 8
        %s265 = scalar_lea.vmem [#allocation8], %s264
        %s266 = smul.u32 %s27, 4
        %s267 = sadd.s32 %s266, %s28
        %v268 = vld [vmem:[%s225] sm:$0xff]
        %v269 = vmul.f32 %v268, 15.0
        %v270 = vmax.f32 %v269, 0.0
        %v271 = vmin.f32 %v270, 15.0
        %v272 = vld [vmem:[%s234] sm:$0xff]
        %v273 = vmul.f32 %v272, 15.0
        %v274 = vmax.f32 %v273, 0.0
        %v275 = vmin.f32 %v274, 15.0
        %v276 = vld [vmem:[#allocation7] sm:$0xff]
        %v277 = vfloor.f32 %v271
        %v278 = vsub.f32 %v271, %v277
        %v279 = vmin.f32 %v277, 14.0
        %v280 = vfloor.f32 %v275
        %v281 = vsub.f32 %v275, %v280
        %v282 = vmin.f32 %v280, 14.0
        %v283 = vsub.f32 %v282, %v279
        %vm284 = vcmp.eq.f32.partialorder %v283, 0.0
        %v285 = vsub.f32 1.0, %v281
        %vm286 = vcmp.eq.f32.partialorder %v283, -1.0
        %v287 = vsel %vm286, %v285, 0.0
        %v288 = vsel %vm284, %v281, %v287
        %vm289 = vcmp.eq.f32.partialorder %v283, 1.0
        %v290 = vsel %vm289, %v281, 0.0
        %v291 = vsel %vm284, %v285, %v290
        %v292 = vsub.f32 %v278, 0.5
        %v293 = vmul.f32 %v292, %v292
        %v294 = vmul.f32 %v293, 1.012802e-06
        %v295 = vadd.f32 %v294, -9.694513e-06
        %v296 = vmul.f32 %v295, %v293
        %v297 = vadd.f32 %v296, 7.99289e-05
        %v298 = vmul.f32 %v297, %v293
        %v299 = vadd.f32 %v298, -0.0006111777
        %v300 = vmul.f32 %v299, %v293
        %v301 = vadd.f32 %v300, 0.00424179
        %v302 = vmul.f32 %v301, %v293
        %v303 = vadd.f32 %v302, -0.02490551
        %v304 = vmul.f32 %v303, %v293
        %v305 = vadd.f32 %v304, 15.241171
        %v306 = vmul.f32 %v292, 5.5933186e-05
        %v307 = vadd.f32 %v306, -5.7838643e-05
        %v308 = vmul.f32 %v307, %v292
        %v309 = vadd.f32 %v308, -0.000541425
        %v310 = vmul.f32 %v309, %v292
        %v311 = vadd.f32 %v310, 0.0011301565
        %v312 = vmul.f32 %v311, %v292
        %v313 = vadd.f32 %v312, 0.004364774
        %v314 = vmul.f32 %v313, %v292
        %v315 = vadd.f32 %v314, -0.016059458
        %v316 = vmul.f32 %v315, %v292
        %v317 = vadd.f32 %v316, -0.028778397
        %v318 = vmul.f32 %v317, %v292
        %v319 = vadd.f32 %v318, 0.23500371
        %v320 = vmul.f32 %v319, %v292
        %v321 = vadd.f32 %v320, 0.12245933
        %v322 = vsub.f32 0.0, %v292
        %v323 = vmul.f32 %v322, 5.5933186e-05
        %v324 = vadd.f32 %v323, -5.7838643e-05
        %v325 = vmul.f32 %v324, %v322
        %v326 = vadd.f32 %v325, -0.000541425
        %v327 = vmul.f32 %v326, %v322
        %v328 = vadd.f32 %v327, 0.0011301565
        %v329 = vmul.f32 %v328, %v322
        %v330 = vadd.f32 %v329, 0.004364774
        %v331 = vmul.f32 %v330, %v322
        %v332 = vadd.f32 %v331, -0.016059458
        %v333 = vmul.f32 %v332, %v322
        %v334 = vadd.f32 %v333, -0.028778397
        %v335 = vmul.f32 %v334, %v322
        %v336 = vadd.f32 %v335, 0.23500371
        %v337 = vmul.f32 %v336, %v322
        %v338 = vadd.f32 %v337, 0.12245933
        %v339 = vmul.f32 %v321, %v288
        %v340 = vsub.f32 %v305, %v339
        %v341 = vmul.f32 %v338, %v291
        %v342 = vsub.f32 %v340, %v341
        %v343 = vmul.f32 %v342, %v276
        %344 = vadd.xlane.f32.xlu0 %v343
        %v345 = vpop.xlane.xlu0 %344
        %v346 = vrot.slane %v345, 4
        %v347 = vadd.f32 %v345, %v346
        %v348 = vrot.slane %v347, 2
        %v349 = vadd.f32 %v347, %v348
        %v350 = vrot.slane %v349, 1
        %v351 = vadd.f32 %v349, %v350
        %s352 = vtos %v351
        %v353 = vstv %s352
        %354 = vst [vmem:[%s265] sm:$0xff] %v353
        %s355 = sand.u32 %s129, 1
        %s356 = scalar_lea.sflag [#allocation4], %s355
        %s357 = sand.u32 %s129, 1
        %s358 = smul.addr %s357, 8
        %s359 = scalar_lea.vmem [#allocation8], %s358
        // Predicated region
        $region45: #{tpu_custom_call.1} parent=31 // pred_check
          %p360 = pneg %p139
        $region46: #{tpu_custom_call.1} parent=31 // pred_check_branch
          %362 = sbr.rel (%p360) target = $region48
        $region47: #{tpu_custom_call.1} parent=31 // pred_region
          %s363 = smul.u32 %s27, 4
          %s364 = sadd.s32 %s363, %s28
          %s366 = ssub.s32 128, 128
          %367 = vsyncadd %s356, %s366
          %s368 = smul.addr %s364, 128
          %s369 = scalar_lea.hbm %s3, %s368
          %s371 = sshll.u32 %s359, 4
          %s372 = int_to_ptr.vmem [resolvable:$true] %s371
          %374 = dma.vmem_to_hbm [thread:$0]  %s372, 128, %s369, %s356
        $region48: #{tpu_custom_call.1} parent=31 // pred_fallthru
          _
      $region32: #{tpu_custom_call.1} parent=5 // pred_fallthru
        _
      %p375 = scmp.le.s32.totalorder 2, %s18
      // Predicated region
      $region49: #{tpu_custom_call.1} parent=5 // pred_check
        %p376 = pneg %p375
      $region50: #{tpu_custom_call.1} parent=5 // pred_check_branch
        %378 = sbr.rel (%p376) target = $region52
      $region51: #{tpu_custom_call.1} parent=5 // pred_region
        %s379 = ssub.s32 %s18, 2
        // Predicated region
        $region53: #{tpu_custom_call.1} parent=51 // pred_check
          %p380 = pneg %p145
        $region54: #{tpu_custom_call.1} parent=51 // pred_check_branch
          %382 = sbr.rel (%p380) target = $region56
        $region55: #{tpu_custom_call.1} parent=51 // pred_region
          %s383 = sand.u32 %s130, 1
          %s384 = scalar_lea.sflag [#allocation4], %s383
          %s385 = sand.u32 %s130, 1
          %s386 = smul.addr %s385, 8
          %s387 = scalar_lea.vmem [#allocation8], %s386
          %388 = dma.done %s384, 128
        $region56: #{tpu_custom_call.1} parent=51 // pred_fallthru
          _
      $region52: #{tpu_custom_call.1} parent=5 // pred_fallthru
        _
    $region6: #{tpu_custom_call.1} parent=1 // loop_footer
      %s22 = sadd.s32 1, %s18
    $region7: #{tpu_custom_call.1} parent=1 // loop_footer_branch
      %17 = sbr.rel target = $region3
    $region8: #{tpu_custom_call.1} parent=1 // loop_exit
      _
    %389 = vsyncpa [#allocation3], 1
    %s390 = scalar_lea.sflag [#allocation3], 1
    %391 = vsyncpa %s390, 1
    %392 = vsyncpa [#allocation6], 1
    %s393 = scalar_lea.sflag [#allocation6], 1
    %394 = vsyncpa %s393, 1
    %395 = vsyncpa [#allocation4], 1
    %s396 = scalar_lea.sflag [#allocation4], 1
    %397 = vsyncpa %s396, 1

</llo_original>
